<compile_context>
chip_gen: v7x
topology: tpu7x:2x2x1
jax: 0.10.0
libtpu: 0.0.40
codegen_flags: <defaults>
</compile_context>

<pallas_src>
import jax
import jax.numpy as jnp
from jax.experimental import pallas as pl
from jax.experimental.pallas import tpu as pltpu

LANE = 128
SUBLANE = 8


def _round_up(v, m):
    return (v + m - 1) // m * m


def _cdiv(a, b):
    return -(-a // b)


# ----------------------------------------------------------------------------
# Kernel body: one batch tile, both encoders.
# ----------------------------------------------------------------------------
def _dual_encoder_kernel(x_ref, xm_ref, y_ref, ym_ref,
                         w1_ref, b1_ref, w2_ref, b2_ref,
                         ox_ref, oy_ref):
    # x_ref / y_ref : (TB, S, D)   sequence tiles (input dtype, f32 or bf16)
    # xm_ref/ ym_ref: (TB, S, 1)   mask tiles, f32 0/1
    # w*_ref        : (D, H)       projection weights (VMEM-resident)
    # b*_ref        : (1, H)       bias
    # o*_ref        : (TB, H)      output tiles
    def encode(seq_ref, mask_ref, w_ref, b_ref, o_ref):
        seq = seq_ref[...]                              # (TB, S, D)
        m = mask_ref[...]                               # (TB, S, 1) f32
        # Masked mean pooling over the sequence axis.  Elementwise multiply in
        # the streamed dtype (bf16 VPU on v6e/v7x), f32 accumulation for the
        # reduction.
        masked = seq * m.astype(seq.dtype)              # lane-splat broadcast
        pooled = jnp.sum(masked.astype(jnp.float32), axis=1)       # (TB, D)
        denom = jnp.maximum(jnp.sum(m, axis=1), 1.0)                # (TB, 1)
        pooled = pooled / denom                         # exact divide (cheap, HBM-bound)
        # Linear projection + tanh; f32 accumulation on the MXU.
        rep = jnp.dot(pooled, w_ref[...].astype(jnp.float32),
                      preferred_element_type=jnp.float32)
        o_ref[...] = jnp.tanh(rep + b_ref[...]).astype(o_ref.dtype)

    encode(x_ref, xm_ref, w1_ref, b1_ref, ox_ref)
    encode(y_ref, ym_ref, w2_ref, b2_ref, oy_ref)


# ----------------------------------------------------------------------------
# Tiling / VMEM budgeting.
# ----------------------------------------------------------------------------
def _vmem_limit_bytes():
    """Per-generation scoped-VMEM limit (conservative, leaves headroom)."""
    kind = ""
    try:
        kind = jax.devices()[0].device_kind.lower()
    except Exception:
        pass
    if "v6" in kind:
        return 64 * 1024 * 1024          # 128 MiB physical on v6e
    # v5e (128 MiB physical, 16 MiB scoped default -> explicit raise needed)
    # and v7x (64 MiB physical) both get a safe 48 MiB cap.
    return 48 * 1024 * 1024


def _resident_weight_bytes(D, H):
    # W (D,H) + b (1,H), f32, two encoders, conservatively assume the default
    # double-buffering (pl.Buffered(1) would halve this).
    Hp = _round_up(H, LANE)
    Dp8 = _round_up(D, SUBLANE)
    return 2 * 2 * (Dp8 * Hp + SUBLANE * Hp) * 4


def _choose_batch_tile(B, S, D, H, seq_itemsize, stream_budget_bytes):
    """Biggest batch tile whose double-buffered streams fit the VMEM budget."""
    Sp = _round_up(S, SUBLANE)
    Dp = _round_up(D, LANE)            # VMEM lane padding of the last dim
    Hp = _round_up(H, LANE)
    # Per batch-row VMEM bytes: (x + y) tiles, both masks (lane-padded 1->128),
    # both output tiles; everything double-buffered by the pipeline.
    per_row = 2 * 2 * (Sp * Dp * seq_itemsize      # sequence tiles
                       + Sp * LANE * 4             # (TB, S, 1) masks
                       + Hp * 4)                   # output tiles (f32)
    tb_max = stream_budget_bytes // max(1, per_row)
    tb_max = max(SUBLANE, min((tb_max // SUBLANE) * SUBLANE, 2048))
    # Balance tiles so batch padding stays below one tile.
    n_tiles = _cdiv(B, tb_max)
    tb = _round_up(_cdiv(B, n_tiles), SUBLANE)
    return max(SUBLANE, tb)
    # TODO(synk): if a single batch row (S * D) ever exceeds the VMEM budget,
    # the sequence axis itself would need tiling; not implemented here.


# ----------------------------------------------------------------------------
# Wrapper.
# ----------------------------------------------------------------------------
def pallas_dual_encode(x, x_mask, y, y_mask, w1, b1, w2, b2):
    """Fused dual encoder: both encoders in a single tiled pallas_call."""
    assert x.shape == y.shape and x_mask.shape == y_mask.shape
    assert w1.shape == w2.shape
    B, S, D = x.shape
    H = w1.shape[-1]

    vmem_limit = _vmem_limit_bytes()
    stream_budget = max(
        2 * 1024 * 1024,
        vmem_limit - _resident_weight_bytes(D, H) - 4 * 1024 * 1024)
    TB = _choose_batch_tile(B, S, D, H, x.dtype.itemsize, stream_budget)
    Bp = _cdiv(B, TB) * TB             # batch padded to a whole number of tiles
    pad_rows_n = Bp - B

    def pad_rows(a):
        if pad_rows_n == 0:
            return a
        widths = ((0, pad_rows_n),) + ((0, 0),) * (a.ndim - 1)
        return jnp.pad(a, widths)

    xs = pad_rows(x)                                        # (Bp, S, D)
    ys = pad_rows(y)
    xm = pad_rows(x_mask.astype(jnp.float32))[..., None]    # (Bp, S, 1)
    ym = pad_rows(y_mask.astype(jnp.float32))[..., None]
    w1f = w1.astype(jnp.float32)
    w2f = w2.astype(jnp.float32)
    b1f = b1.reshape(1, H).astype(jnp.float32)
    b2f = b2.reshape(1, H).astype(jnp.float32)

    grid = (Bp // TB,)
    seq_spec = pl.BlockSpec((TB, S, D), lambda i: (i, 0, 0))   # full (S, D) block
    mask_spec = pl.BlockSpec((TB, S, 1), lambda i: (i, 0, 0))
    w_spec = pl.BlockSpec((D, H), lambda i: (0, 0))            # VMEM-resident
    b_spec = pl.BlockSpec((1, H), lambda i: (0, 0))
    out_spec = pl.BlockSpec((TB, H), lambda i: (i, 0))

    ox, oy = pl.pallas_call(
        _dual_encoder_kernel,
        out_shape=(jax.ShapeDtypeStruct((Bp, H), x.dtype),
                   jax.ShapeDtypeStruct((Bp, H), y.dtype)),
        grid_spec=pltpu.PrefetchScalarGridSpec(
            num_scalar_prefetch=0,
            grid=grid,
            in_specs=[seq_spec, mask_spec,        # x stream
                      seq_spec, mask_spec,        # y stream
                      w_spec, b_spec,             # encoder 1 params
                      w_spec, b_spec],            # encoder 2 params
            out_specs=(out_spec, out_spec),
        ),
        compiler_params=pltpu.CompilerParams(
            # Single batch-tile axis kept "parallel" so v7x's 2 TensorCores
            # each stream half of the batch (no-op on v5e/v6e).
            dimension_semantics=("parallel",),
            vmem_limit_bytes=vmem_limit,
        ),
    )(xs, xm, ys, ym, w1f, b1f, w2f, b2f)

    return ox[:B], oy[:B]


def dual_encoder_forward(params, x, x_mask, y, y_mask):
    """Equivalent of DualEncoder.forward: returns (x_rep, y_rep)."""
    return pallas_dual_encode(
        x, x_mask, y, y_mask,
        params["w1"], params["b1"], params["w2"], params["b2"],
    )
    # TODO(synk): the optional type='CrossEntropy' Linear->ReLU->Linear head is
    # constructed but never used in forward(), so it is not implemented here.


def _reference_encode(x, mask, w, b):
    masked = x * mask[:, :, None]
    pooled = masked.sum(axis=1) / jnp.maximum(mask.sum(axis=1, keepdims=True), 1.0)
    return jnp.tanh(pooled @ w + b)


if __name__ == "__main__":
    B, S, D, H = 2, 8, 32, 32

    key = jax.random.PRNGKey(0)
    kx, ky, kw1, kb1, kw2, kb2 = jax.random.split(key, 6)

    x = jax.random.normal(kx, (B, S, D), dtype=jnp.float32)
    y = jax.random.normal(ky, (B, S, D), dtype=jnp.float32)

    # Deterministic masks: first sample full length, second sample partial.
    x_mask = jnp.stack([jnp.ones((S,)), (jnp.arange(S) < S // 2).astype(jnp.float32)])
    y_mask = jnp.stack([(jnp.arange(S) < 6).astype(jnp.float32), jnp.ones((S,))])
    x_mask = x_mask.astype(jnp.float32)
    y_mask = y_mask.astype(jnp.float32)

    scale = 0.05
    params = {
        "w1": scale * jax.random.normal(kw1, (D, H), dtype=jnp.float32),
        "b1": scale * jax.random.normal(kb1, (1, H), dtype=jnp.float32),
        "w2": scale * jax.random.normal(kw2, (D, H), dtype=jnp.float32),
        "b2": scale * jax.random.normal(kb2, (1, H), dtype=jnp.float32),
    }

    forward = jax.jit(dual_encoder_forward)
    x_rep, y_rep = forward(params, x, x_mask, y, y_mask)
    jax.block_until_ready((x_rep, y_rep))

    # Correctness check against a pure-JAX reference of the same encoders.
    x_ref = _reference_encode(x, x_mask, params["w1"], params["b1"])
    y_ref = _reference_encode(y, y_mask, params["w2"], params["b2"])
    assert jnp.allclose(x_rep, x_ref, atol=2e-3, rtol=1e-3), "x_rep mismatch"
    assert jnp.allclose(y_rep, y_ref, atol=2e-3, rtol=1e-3), "y_rep mismatch"
    assert x_rep.shape == (B, H) and y_rep.shape == (B, H)

    print("KERNEL_OK")
</pallas_src>

<mosaic_0001>
module attributes {stable_mosaic.version = 11 : i64} {
  func.func @_dual_encoder_kernel(%arg0: i32, %arg1: memref<8x8x32xf32, #tpu.memory_space<vmem>>, %arg2: memref<8x8x1xf32, #tpu.memory_space<vmem>>, %arg3: memref<8x8x32xf32, #tpu.memory_space<vmem>>, %arg4: memref<8x8x1xf32, #tpu.memory_space<vmem>>, %arg5: memref<32x32xf32, #tpu.memory_space<vmem>>, %arg6: memref<1x32xf32, #tpu.memory_space<vmem>>, %arg7: memref<32x32xf32, #tpu.memory_space<vmem>>, %arg8: memref<1x32xf32, #tpu.memory_space<vmem>>, %arg9: memref<8x32xf32, #tpu.memory_space<vmem>>, %arg10: memref<8x32xf32, #tpu.memory_space<vmem>>) attributes {dimension_semantics = [#tpu.dimension_semantics<parallel>], iteration_bounds = array<i64: 1>, scalar_prefetch = 0 : i64, scratch_operands = 0 : i64, tpu.core_type = #tpu.core_type<tc>, window_params = [{transform_indices = @transform_0, window_bounds = array<i64: 8, 8, 32>}, {transform_indices = @transform_1, window_bounds = array<i64: 8, 8, 1>}, {transform_indices = @transform_2, window_bounds = array<i64: 8, 8, 32>}, {transform_indices = @transform_3, window_bounds = array<i64: 8, 8, 1>}, {pipeline_mode = #tpu.pipeline_mode<synchronous>, transform_indices = @transform_4, window_bounds = array<i64: 32, 32>}, {pipeline_mode = #tpu.pipeline_mode<synchronous>, transform_indices = @transform_5, window_bounds = array<i64: 1, 32>}, {pipeline_mode = #tpu.pipeline_mode<synchronous>, transform_indices = @transform_6, window_bounds = array<i64: 32, 32>}, {pipeline_mode = #tpu.pipeline_mode<synchronous>, transform_indices = @transform_7, window_bounds = array<i64: 1, 32>}, {transform_indices = @transform_8, window_bounds = array<i64: 8, 32>}, {transform_indices = @transform_9, window_bounds = array<i64: 8, 32>}]} {
    %c0 = arith.constant 0 : index
    %c0_0 = arith.constant 0 : index
    %c0_1 = arith.constant 0 : index
    %0 = vector.load %arg1[%c0, %c0_0, %c0_1] : memref<8x8x32xf32, #tpu.memory_space<vmem>>, vector<8x8x32xf32>
    %c0_2 = arith.constant 0 : index
    %c0_3 = arith.constant 0 : index
    %c0_4 = arith.constant 0 : index
    %1 = vector.load %arg2[%c0_2, %c0_3, %c0_4] : memref<8x8x1xf32, #tpu.memory_space<vmem>>, vector<8x8x1xf32>
    %2 = vector.broadcast %1 : vector<8x8x1xf32> to vector<8x8x32xf32>
    %3 = arith.mulf %0, %2 : vector<8x8x32xf32>
    %cst = arith.constant dense<0.000000e+00> : vector<8x32xf32>
    %4 = vector.multi_reduction <add>, %3, %cst [1] : vector<8x8x32xf32> to vector<8x32xf32>
    %cst_5 = arith.constant dense<0.000000e+00> : vector<8x1xf32>
    %5 = vector.multi_reduction <add>, %1, %cst_5 [1] : vector<8x8x1xf32> to vector<8x1xf32>
    %cst_6 = arith.constant 1.000000e+00 : f32
    %6 = vector.broadcast %cst_6 : f32 to vector<8x1xf32>
    %7 = arith.maximumf %5, %6 : vector<8x1xf32>
    %8 = vector.broadcast %7 : vector<8x1xf32> to vector<8x32xf32>
    %9 = arith.divf %4, %8 : vector<8x32xf32>
    %c0_7 = arith.constant 0 : index
    %c0_8 = arith.constant 0 : index
    %10 = vector.load %arg5[%c0_7, %c0_8] : memref<32x32xf32, #tpu.memory_space<vmem>>, vector<32x32xf32>
    %cst_9 = arith.constant dense<0.000000e+00> : vector<8x32xf32>
    %11 = tpu.matmul %9, %10, %cst_9 {dimension_numbers = #tpu.dot_dimension_numbers<[1], [0], [0], [1], [0, 0, 1, 1], [], []>} : vector<8x32xf32>, vector<32x32xf32>, vector<8x32xf32> -> vector<8x32xf32>
    %c0_10 = arith.constant 0 : index
    %c0_11 = arith.constant 0 : index
    %12 = vector.load %arg6[%c0_10, %c0_11] : memref<1x32xf32, #tpu.memory_space<vmem>>, vector<1x32xf32>
    %13 = vector.broadcast %12 : vector<1x32xf32> to vector<8x32xf32>
    %14 = arith.addf %11, %13 : vector<8x32xf32>
    %15 = math.tanh %14 : vector<8x32xf32>
    %c0_12 = arith.constant 0 : index
    %c0_13 = arith.constant 0 : index
    %16 = vector.load %arg9[%c0_12, %c0_13] : memref<8x32xf32, #tpu.memory_space<vmem>>, vector<8x32xf32>
    tpu.vector_store %arg9[%c0_12, %c0_13], %15 {strides = array<i32>} : memref<8x32xf32, #tpu.memory_space<vmem>>, vector<8x32xf32>,
    %c0_14 = arith.constant 0 : index
    %c0_15 = arith.constant 0 : index
    %c0_16 = arith.constant 0 : index
    %17 = vector.load %arg3[%c0_14, %c0_15, %c0_16] : memref<8x8x32xf32, #tpu.memory_space<vmem>>, vector<8x8x32xf32>
    %c0_17 = arith.constant 0 : index
    %c0_18 = arith.constant 0 : index
    %c0_19 = arith.constant 0 : index
    %18 = vector.load %arg4[%c0_17, %c0_18, %c0_19] : memref<8x8x1xf32, #tpu.memory_space<vmem>>, vector<8x8x1xf32>
    %19 = vector.broadcast %18 : vector<8x8x1xf32> to vector<8x8x32xf32>
    %20 = arith.mulf %17, %19 : vector<8x8x32xf32>
    %cst_20 = arith.constant dense<0.000000e+00> : vector<8x32xf32>
    %21 = vector.multi_reduction <add>, %20, %cst_20 [1] : vector<8x8x32xf32> to vector<8x32xf32>
    %cst_21 = arith.constant dense<0.000000e+00> : vector<8x1xf32>
    %22 = vector.multi_reduction <add>, %18, %cst_21 [1] : vector<8x8x1xf32> to vector<8x1xf32>
    %cst_22 = arith.constant 1.000000e+00 : f32
    %23 = vector.broadcast %cst_22 : f32 to vector<8x1xf32>
    %24 = arith.maximumf %22, %23 : vector<8x1xf32>
    %25 = vector.broadcast %24 : vector<8x1xf32> to vector<8x32xf32>
    %26 = arith.divf %21, %25 : vector<8x32xf32>
    %c0_23 = arith.constant 0 : index
    %c0_24 = arith.constant 0 : index
    %27 = vector.load %arg7[%c0_23, %c0_24] : memref<32x32xf32, #tpu.memory_space<vmem>>, vector<32x32xf32>
    %cst_25 = arith.constant dense<0.000000e+00> : vector<8x32xf32>
    %28 = tpu.matmul %26, %27, %cst_25 {dimension_numbers = #tpu.dot_dimension_numbers<[1], [0], [0], [1], [0, 0, 1, 1], [], []>} : vector<8x32xf32>, vector<32x32xf32>, vector<8x32xf32> -> vector<8x32xf32>
    %c0_26 = arith.constant 0 : index
    %c0_27 = arith.constant 0 : index
    %29 = vector.load %arg8[%c0_26, %c0_27] : memref<1x32xf32, #tpu.memory_space<vmem>>, vector<1x32xf32>
    %30 = vector.broadcast %29 : vector<1x32xf32> to vector<8x32xf32>
    %31 = arith.addf %28, %30 : vector<8x32xf32>
    %32 = math.tanh %31 : vector<8x32xf32>
    %c0_28 = arith.constant 0 : index
    %c0_29 = arith.constant 0 : index
    %33 = vector.load %arg10[%c0_28, %c0_29] : memref<8x32xf32, #tpu.memory_space<vmem>>, vector<8x32xf32>
    tpu.vector_store %arg10[%c0_28, %c0_29], %32 {strides = array<i32>} : memref<8x32xf32, #tpu.memory_space<vmem>>, vector<8x32xf32>,
    return
  }
  func.func @transform_0(%arg0: i32) -> (i32, i32, i32) {
    %c0_i32 = arith.constant 0 : i32
    %c0_i32_0 = arith.constant 0 : i32
    %c0_i32_1 = arith.constant 0 : i32
    return %arg0, %c0_i32, %c0_i32_0 : i32, i32, i32
  }
  func.func @transform_1(%arg0: i32) -> (i32, i32, i32) {
    %c0_i32 = arith.constant 0 : i32
    %c0_i32_0 = arith.constant 0 : i32
    %c0_i32_1 = arith.constant 0 : i32
    return %arg0, %c0_i32, %c0_i32_0 : i32, i32, i32
  }
  func.func @transform_2(%arg0: i32) -> (i32, i32, i32) {
    %c0_i32 = arith.constant 0 : i32
    %c0_i32_0 = arith.constant 0 : i32
    %c0_i32_1 = arith.constant 0 : i32
    return %arg0, %c0_i32, %c0_i32_0 : i32, i32, i32
  }
  func.func @transform_3(%arg0: i32) -> (i32, i32, i32) {
    %c0_i32 = arith.constant 0 : i32
    %c0_i32_0 = arith.constant 0 : i32
    %c0_i32_1 = arith.constant 0 : i32
    return %arg0, %c0_i32, %c0_i32_0 : i32, i32, i32
  }
  func.func @transform_4(%arg0: i32) -> (i32, i32) {
    %c0_i32 = arith.constant 0 : i32
    %c0_i32_0 = arith.constant 0 : i32
    %c0_i32_1 = arith.constant 0 : i32
    return %c0_i32, %c0_i32_0 : i32, i32
  }
  func.func @transform_5(%arg0: i32) -> (i32, i32) {
    %c0_i32 = arith.constant 0 : i32
    %c0_i32_0 = arith.constant 0 : i32
    %c0_i32_1 = arith.constant 0 : i32
    return %c0_i32, %c0_i32_0 : i32, i32
  }
  func.func @transform_6(%arg0: i32) -> (i32, i32) {
    %c0_i32 = arith.constant 0 : i32
    %c0_i32_0 = arith.constant 0 : i32
    %c0_i32_1 = arith.constant 0 : i32
    return %c0_i32, %c0_i32_0 : i32, i32
  }
  func.func @transform_7(%arg0: i32) -> (i32, i32) {
    %c0_i32 = arith.constant 0 : i32
    %c0_i32_0 = arith.constant 0 : i32
    %c0_i32_1 = arith.constant 0 : i32
    return %c0_i32, %c0_i32_0 : i32, i32
  }
  func.func @transform_8(%arg0: i32) -> (i32, i32) {
    %c0_i32 = arith.constant 0 : i32
    %c0_i32_0 = arith.constant 0 : i32
    return %arg0, %c0_i32 : i32, i32
  }
  func.func @transform_9(%arg0: i32) -> (i32, i32) {
    %c0_i32 = arith.constant 0 : i32
    %c0_i32_0 = arith.constant 0 : i32
    return %arg0, %c0_i32 : i32, i32
  }
}

</mosaic_0001>

<llo_original>
// kernel: dual_encoder_forward.1
$region0: #{dual_encoder_forward.1}
  #allocation0 [shape = 'u32[]', space=smem, size = 0x4, offset = 0x4, fixed_abs, tag = 'smem constant byte address 0x4 - core index']
  #allocation1 [shape = 'u32[144,128]{1,0:T(1,128)}', space=vmem, size = 0x12000, scoped, tag = 'internal scratch']
  %s0 = inlined_call_operand.vmem [shape: f32[8,8,32], index: 0, kind: input, shape index: {}]
  %s1 = inlined_call_operand.vmem [shape: f32[8,8,1], index: 1, kind: input, shape index: {}]
  %s2 = inlined_call_operand.vmem [shape: f32[8,8,32], index: 2, kind: input, shape index: {}]
  %s3 = inlined_call_operand.vmem [shape: f32[8,8,1], index: 3, kind: input, shape index: {}]
  %s4 = inlined_call_operand.vmem [shape: f32[32,32], index: 4, kind: input, shape index: {}]
  %s5 = inlined_call_operand.vmem [shape: f32[1,32], index: 5, kind: input, shape index: {}]
  %s6 = inlined_call_operand.vmem [shape: f32[32,32], index: 6, kind: input, shape index: {}]
  %s7 = inlined_call_operand.vmem [shape: f32[1,32], index: 7, kind: input, shape index: {}]
  %s8 = inlined_call_operand.vmem [shape: f32[8,32], index: 8, kind: output, shape index: {0}]
  %s9 = inlined_call_operand.vmem [shape: f32[8,32], index: 9, kind: output, shape index: {1}]
  %10 = xla_tuple %s8, %s9
  %s11 = sld [smem:[#allocation0]]
  $region50: #{dual_encoder_forward.1} parent=0
    _
  %s13 = ssub.s32 1, %s11
  %s14 = scalar_select 0, %s13, %s11
  // Predicated region
  $region2: #{dual_encoder_forward.1} parent=0 // pred_check
    _
  $region3: #{dual_encoder_forward.1} parent=0 // pred_check_branch
    %16 = sbr.rel (0) target = $region5
  $region4: #{dual_encoder_forward.1} parent=0 // pred_region
    _
  $region5: #{dual_encoder_forward.1} parent=0 // pred_fallthru
    _
  // Predicated region
  $region6: #{dual_encoder_forward.1} parent=0 // pred_check
    _
  $region7: #{dual_encoder_forward.1} parent=0 // pred_check_branch
    %18 = sbr.rel (0) target = $region9
  $region8: #{dual_encoder_forward.1} parent=0 // pred_region
    _
  $region9: #{dual_encoder_forward.1} parent=0 // pred_fallthru
    _
  // Predicated region
  $region10: #{dual_encoder_forward.1} parent=0 // pred_check
    _
  $region11: #{dual_encoder_forward.1} parent=0 // pred_check_branch
    %20 = sbr.rel (0) target = $region13
  $region12: #{dual_encoder_forward.1} parent=0 // pred_region
    _
  $region13: #{dual_encoder_forward.1} parent=0 // pred_fallthru
    _
  // Predicated region
  $region14: #{dual_encoder_forward.1} parent=0 // pred_check
    _
  $region15: #{dual_encoder_forward.1} parent=0 // pred_check_branch
    %22 = sbr.rel (0) target = $region17
  $region16: #{dual_encoder_forward.1} parent=0 // pred_region
    _
  $region17: #{dual_encoder_forward.1} parent=0 // pred_fallthru
    _
  // Predicated region
  $region18: #{dual_encoder_forward.1} parent=0 // pred_check
    _
  $region19: #{dual_encoder_forward.1} parent=0 // pred_check_branch
    %24 = sbr.rel (0) target = $region21
  $region20: #{dual_encoder_forward.1} parent=0 // pred_region
    _
  $region21: #{dual_encoder_forward.1} parent=0 // pred_fallthru
    _
  // Predicated region
  $region22: #{dual_encoder_forward.1} parent=0 // pred_check
    _
  $region23: #{dual_encoder_forward.1} parent=0 // pred_check_branch
    %26 = sbr.rel (0) target = $region25
  $region24: #{dual_encoder_forward.1} parent=0 // pred_region
    _
  $region25: #{dual_encoder_forward.1} parent=0 // pred_fallthru
    _
  // Predicated region
  $region26: #{dual_encoder_forward.1} parent=0 // pred_check
    _
  $region27: #{dual_encoder_forward.1} parent=0 // pred_check_branch
    %28 = sbr.rel (0) target = $region29
  $region28: #{dual_encoder_forward.1} parent=0 // pred_region
    _
  $region29: #{dual_encoder_forward.1} parent=0 // pred_fallthru
    _
  // Predicated region
  $region30: #{dual_encoder_forward.1} parent=0 // pred_check
    _
  $region31: #{dual_encoder_forward.1} parent=0 // pred_check_branch
    %30 = sbr.rel (0) target = $region33
  $region32: #{dual_encoder_forward.1} parent=0 // pred_region
    _
  $region33: #{dual_encoder_forward.1} parent=0 // pred_fallthru
    _
  %v31 = vld [vmem:[%s0] sm:$0xff]
  %v32 = vld [vmem:[%s0 + $0x8] sm:$0xff]
  %v33 = vld [vmem:[%s0 + $0x10] sm:$0xff]
  %v34 = vld [vmem:[%s0 + $0x18] sm:$0xff]
  %v35 = vld [vmem:[%s0 + $0x20] sm:$0xff]
  %v36 = vld [vmem:[%s0 + $0x28] sm:$0xff]
  %v37 = vld [vmem:[%s0 + $0x30] sm:$0xff]
  %v38 = vld [vmem:[%s0 + $0x38] sm:$0xff]
  %v39 = vld [vmem:[%s1] sm:$0xff]
  %v40 = vld [vmem:[%s1 + $0x8] sm:$0xff]
  %v41 = vld [vmem:[%s1 + $0x10] sm:$0xff]
  %v42 = vld [vmem:[%s1 + $0x18] sm:$0xff]
  %v43 = vld [vmem:[%s1 + $0x20] sm:$0xff]
  %v44 = vld [vmem:[%s1 + $0x28] sm:$0xff]
  %v45 = vld [vmem:[%s1 + $0x30] sm:$0xff]
  %v46 = vld [vmem:[%s1 + $0x38] sm:$0xff]
  %48 = vset.pattern.permute.xlu0 0
  %49 = vperm.xlu0 %48, %v39
  %v50 = vpop.permute.xlu0 %49
  %53 = vset.pattern.permute.xlu0 0
  %54 = vperm.xlu0 %53, %v40
  %v55 = vpop.permute.xlu0 %54
  %58 = vset.pattern.permute.xlu0 0
  %59 = vperm.xlu0 %58, %v41
  %v60 = vpop.permute.xlu0 %59
  %63 = vset.pattern.permute.xlu0 0
  %64 = vperm.xlu0 %63, %v42
  %v65 = vpop.permute.xlu0 %64
  %68 = vset.pattern.permute.xlu0 0
  %69 = vperm.xlu0 %68, %v43
  %v70 = vpop.permute.xlu0 %69
  %73 = vset.pattern.permute.xlu0 0
  %74 = vperm.xlu0 %73, %v44
  %v75 = vpop.permute.xlu0 %74
  %78 = vset.pattern.permute.xlu0 0
  %79 = vperm.xlu0 %78, %v45
  %v80 = vpop.permute.xlu0 %79
  %83 = vset.pattern.permute.xlu0 0
  %84 = vperm.xlu0 %83, %v46
  %v85 = vpop.permute.xlu0 %84
  %v87 = vmul.f32 %v31, %v50
  %v88 = vmul.f32 %v32, %v55
  %v89 = vmul.f32 %v33, %v60
  %v90 = vmul.f32 %v34, %v65
  %v91 = vmul.f32 %v35, %v70
  %v92 = vmul.f32 %v36, %v75
  %v93 = vmul.f32 %v37, %v80
  %v94 = vmul.f32 %v38, %v85
  %vm95 = vcmask 261120
  %v96 = vsel %vm95, %v87, 0.0
  %v97 = vrot.slane %v96, 4
  %v98 = vadd.f32 %v96, %v97
  %v99 = vrot.slane %v98, 2
  %v100 = vadd.f32 %v98, %v99
  %v101 = vrot.slane %v100, 1
  %v102 = vadd.f32 %v100, %v101
  %v103 = vsel %vm95, %v88, 0.0
  %v104 = vrot.slane %v103, 4
  %v105 = vadd.f32 %v103, %v104
  %v106 = vrot.slane %v105, 2
  %v107 = vadd.f32 %v105, %v106
  %v108 = vrot.slane %v107, 1
  %v109 = vadd.f32 %v107, %v108
  %v110 = vsel %vm95, %v89, 0.0
  %v111 = vrot.slane %v110, 4
  %v112 = vadd.f32 %v110, %v111
  %v113 = vrot.slane %v112, 2
  %v114 = vadd.f32 %v112, %v113
  %v115 = vrot.slane %v114, 1
  %v116 = vadd.f32 %v114, %v115
  %v117 = vsel %vm95, %v90, 0.0
  %v118 = vrot.slane %v117, 4
  %v119 = vadd.f32 %v117, %v118
  %v120 = vrot.slane %v119, 2
  %v121 = vadd.f32 %v119, %v120
  %v122 = vrot.slane %v121, 1
  %v123 = vadd.f32 %v121, %v122
  %v124 = vsel %vm95, %v91, 0.0
  %v125 = vrot.slane %v124, 4
  %v126 = vadd.f32 %v124, %v125
  %v127 = vrot.slane %v126, 2
  %v128 = vadd.f32 %v126, %v127
  %v129 = vrot.slane %v128, 1
  %v130 = vadd.f32 %v128, %v129
  %v131 = vsel %vm95, %v92, 0.0
  %v132 = vrot.slane %v131, 4
  %v133 = vadd.f32 %v131, %v132
  %v134 = vrot.slane %v133, 2
  %v135 = vadd.f32 %v133, %v134
  %v136 = vrot.slane %v135, 1
  %v137 = vadd.f32 %v135, %v136
  %v138 = vsel %vm95, %v93, 0.0
  %v139 = vrot.slane %v138, 4
  %v140 = vadd.f32 %v138, %v139
  %v141 = vrot.slane %v140, 2
  %v142 = vadd.f32 %v140, %v141
  %v143 = vrot.slane %v142, 1
  %v144 = vadd.f32 %v142, %v143
  %v145 = vsel %vm95, %v94, 0.0
  %v146 = vrot.slane %v145, 4
  %v147 = vadd.f32 %v145, %v146
  %v148 = vrot.slane %v147, 2
  %v149 = vadd.f32 %v147, %v148
  %v150 = vrot.slane %v149, 1
  %v151 = vadd.f32 %v149, %v150
  %vm152 = vcmask 7168
  %v153 = vsel %vm152, %v39, 0.0
  %v154 = vrot.slane %v153, 4
  %v155 = vadd.f32 %v153, %v154
  %v156 = vrot.slane %v155, 2
  %v157 = vadd.f32 %v155, %v156
  %v158 = vrot.slane %v157, 1
  %v159 = vadd.f32 %v157, %v158
  %v160 = vsel %vm152, %v40, 0.0
  %v161 = vrot.slane %v160, 4
  %v162 = vadd.f32 %v160, %v161
  %v163 = vrot.slane %v162, 2
  %v164 = vadd.f32 %v162, %v163
  %v165 = vrot.slane %v164, 1
  %v166 = vadd.f32 %v164, %v165
  %v167 = vsel %vm152, %v41, 0.0
  %v168 = vrot.slane %v167, 4
  %v169 = vadd.f32 %v167, %v168
  %v170 = vrot.slane %v169, 2
  %v171 = vadd.f32 %v169, %v170
  %v172 = vrot.slane %v171, 1
  %v173 = vadd.f32 %v171, %v172
  %v174 = vsel %vm152, %v42, 0.0
  %v175 = vrot.slane %v174, 4
  %v176 = vadd.f32 %v174, %v175
  %v177 = vrot.slane %v176, 2
  %v178 = vadd.f32 %v176, %v177
  %v179 = vrot.slane %v178, 1
  %v180 = vadd.f32 %v178, %v179
  %v181 = vsel %vm152, %v43, 0.0
  %v182 = vrot.slane %v181, 4
  %v183 = vadd.f32 %v181, %v182
  %v184 = vrot.slane %v183, 2
  %v185 = vadd.f32 %v183, %v184
  %v186 = vrot.slane %v185, 1
  %v187 = vadd.f32 %v185, %v186
  %v188 = vsel %vm152, %v44, 0.0
  %v189 = vrot.slane %v188, 4
  %v190 = vadd.f32 %v188, %v189
  %v191 = vrot.slane %v190, 2
  %v192 = vadd.f32 %v190, %v191
  %v193 = vrot.slane %v192, 1
  %v194 = vadd.f32 %v192, %v193
  %v195 = vsel %vm152, %v45, 0.0
  %v196 = vrot.slane %v195, 4
  %v197 = vadd.f32 %v195, %v196
  %v198 = vrot.slane %v197, 2
  %v199 = vadd.f32 %v197, %v198
  %v200 = vrot.slane %v199, 1
  %v201 = vadd.f32 %v199, %v200
  %v202 = vsel %vm152, %v46, 0.0
  %v203 = vrot.slane %v202, 4
  %v204 = vadd.f32 %v202, %v203
  %v205 = vrot.slane %v204, 2
  %v206 = vadd.f32 %v204, %v205
  %v207 = vrot.slane %v206, 1
  %v208 = vadd.f32 %v206, %v207
  %v209 = vmax.f32 %v159, 1.0
  %v210 = vmax.f32 %v166, 1.0
  %v211 = vmax.f32 %v173, 1.0
  %v212 = vmax.f32 %v180, 1.0
  %v213 = vmax.f32 %v187, 1.0
  %v214 = vmax.f32 %v194, 1.0
  %v215 = vmax.f32 %v201, 1.0
  %v216 = vmax.f32 %v208, 1.0
  %218 = vset.pattern.permute.xlu0 0
  %219 = vperm.xlu0 %218, %v209
  %v220 = vpop.permute.xlu0 %219
  %223 = vset.pattern.permute.xlu0 0
  %224 = vperm.xlu0 %223, %v210
  %v225 = vpop.permute.xlu0 %224
  %228 = vset.pattern.permute.xlu0 0
  %229 = vperm.xlu0 %228, %v211
  %v230 = vpop.permute.xlu0 %229
  %233 = vset.pattern.permute.xlu0 0
  %234 = vperm.xlu0 %233, %v212
  %v235 = vpop.permute.xlu0 %234
  %238 = vset.pattern.permute.xlu0 0
  %239 = vperm.xlu0 %238, %v213
  %v240 = vpop.permute.xlu0 %239
  %243 = vset.pattern.permute.xlu0 0
  %244 = vperm.xlu0 %243, %v214
  %v245 = vpop.permute.xlu0 %244
  %248 = vset.pattern.permute.xlu0 0
  %249 = vperm.xlu0 %248, %v215
  %v250 = vpop.permute.xlu0 %249
  %253 = vset.pattern.permute.xlu0 0
  %254 = vperm.xlu0 %253, %v216
  %v255 = vpop.permute.xlu0 %254
  %v257 = vrcp.pop %v220
  %v258 = vmul.f32 %v102, %v257
  %v259 = vrcp.pop %v225
  %v260 = vmul.f32 %v109, %v259
  %v261 = vrcp.pop %v230
  %v262 = vmul.f32 %v116, %v261
  %v263 = vrcp.pop %v235
  %v264 = vmul.f32 %v123, %v263
  %v265 = vrcp.pop %v240
  %v266 = vmul.f32 %v130, %v265
  %v267 = vrcp.pop %v245
  %v268 = vmul.f32 %v137, %v267
  %v269 = vrcp.pop %v250
  %v270 = vmul.f32 %v144, %v269
  %v271 = vrcp.pop %v255
  %v272 = vmul.f32 %v151, %v271
  %v273 = vld [vmem:[%s4] sm:$0xff]
  %v274 = vld [vmem:[%s4 + $0x8] sm:$0xff]
  %v275 = vld [vmem:[%s4 + $0x10] sm:$0xff]
  %v276 = vld [vmem:[%s4 + $0x18] sm:$0xff]
  %v277 = vld [vmem:[%s5] sm:$0x1]
  %v279 = vlaneseq
  %v280 = vshrl.u32 %v279, 7
  %v281 = vsub.s32 0, %v280
  %v282 = vrot.slane %v277, %v281
  %vm292 = vcmask 1041409
  %v293 = vsel %vm292, %v260, %v258
  %vm294 = vcmask 1042434
  %v295 = vsel %vm294, %v262, %v293
  %vm296 = vcmask 1043459
  %v297 = vsel %vm296, %v264, %v295
  %vm298 = vcmask 1044484
  %v299 = vsel %vm298, %v266, %v297
  %vm300 = vcmask 1045509
  %v301 = vsel %vm300, %v268, %v299
  %vm302 = vcmask 1046534
  %v303 = vsel %vm302, %v270, %v301
  %vm304 = vcmask 1047559
  %v305 = vsel %vm304, %v272, %v303
  %v306 = vsel %vm95, %v305, 0
  %308 = vmatprep.subr.mxu0 0.0
  %309 = vmatpush1.msra.mxu0 %v273
  %310 = vmatprep.subr.mxu0 0.0
  %311 = vmatpush1.msra.mxu0 %v274
  %312 = vmatprep.subr.mxu0 0.0
  %313 = vmatpush1.msra.mxu0 %v275
  %314 = vmatprep.subr.mxu0 0.0
  %315 = vmatpush1.msra.mxu0 %v276
  %316 = vmatprep.subr.mxu0 0.0
  %317 = vmatpush1.msra.mxu0 0.0
  %318 = vmatprep.subr.mxu0 0.0
  %319 = vmatpush1.msra.mxu0 0.0
  %320 = vmatprep.subr.mxu0 0.0
  %321 = vmatpush1.msra.mxu0 0.0
  %322 = vmatprep.subr.mxu0 0.0
  %323 = vmatpush1.msra.mxu0 0.0
  %324 = vmatprep.subr.mxu0 0.0
  %325 = vmatpush1.msra.mxu0 0.0
  %326 = vmatprep.subr.mxu0 0.0
  %327 = vmatpush1.msra.mxu0 0.0
  %328 = vmatprep.subr.mxu0 0.0
  %329 = vmatpush1.msra.mxu0 0.0
  %330 = vmatprep.subr.mxu0 0.0
  %331 = vmatpush1.msra.mxu0 0.0
  %332 = vmatprep.subr.mxu0 0.0
  %333 = vmatpush1.msra.mxu0 0.0
  %334 = vmatprep.subr.mxu0 0.0
  %335 = vmatpush1.msra.mxu0 0.0
  %336 = vmatprep.subr.mxu0 0.0
  %337 = vmatpush1.msra.mxu0 0.0
  %338 = vmatprep.subr.mxu0 0.0
  %339 = vmatpush1.msra.mxu0 0.0
  %340 = vmatprep.subr.mxu0 0.0
  %341 = vmatpush1.msra.mxu0 0.0
  %342 = vmatprep.subr.mxu0 0.0
  %343 = vmatpush1.msra.mxu0 0.0
  %344 = vmatprep.subr.mxu0 0.0
  %345 = vmatpush1.msra.mxu0 0.0
  %346 = vmatprep.subr.mxu0 0.0
  %347 = vmatpush1.msra.mxu0 0.0
  %348 = vmatprep.subr.mxu0 0.0
  %349 = vmatpush1.msra.mxu0 0.0
  %350 = vmatprep.subr.mxu0 0.0
  %351 = vmatpush1.msra.mxu0 0.0
  %352 = vmatprep.subr.mxu0 0.0
  %353 = vmatpush1.msra.mxu0 0.0
  %354 = vmatprep.subr.mxu0 0.0
  %355 = vmatpush1.msra.mxu0 0.0
  %356 = vmatprep.subr.mxu0 0.0
  %357 = vmatpush1.msra.mxu0 0.0
  %358 = vmatprep.subr.mxu0 0.0
  %359 = vmatpush1.msra.mxu0 0.0
  %360 = vmatprep.subr.mxu0 0.0
  %361 = vmatpush1.msra.mxu0 0.0
  %362 = vmatprep.subr.mxu0 0.0
  %363 = vmatpush1.msra.mxu0 0.0
  %364 = vmatprep.subr.mxu0 0.0
  %365 = vmatpush1.msra.mxu0 0.0
  %366 = vmatprep.subr.mxu0 0.0
  %367 = vmatpush1.msra.mxu0 0.0
  %368 = vmatprep.subr.mxu0 0.0
  %369 = vmatpush1.msra.mxu0 0.0
  %370 = vmatprep.subr.mxu0 0.0
  %371 = vmatpush1.msra.mxu0 0.0
  %372 = vmatprep.mubr.f32.mxu0 0.0
  %373 = vmatmul.mubr.f32.gmra.mrb[0].mxu0 %v306
  %v374 = vpop.f32.mrb[0].mxu0
  %v375 = vadd.f32 %v282, %v374
  %v376 = vpop.f32.mrb[0].mxu0
  %377 = vdwg.mxu0
  %v378 = vtanh.pop %v375
  %379 = vst.msk [vmem:[%s8] sm:$0xff] %vm95, %v378
  %v380 = vld [vmem:[%s2] sm:$0xff]
  %v381 = vld [vmem:[%s2 + $0x8] sm:$0xff]
  %v382 = vld [vmem:[%s2 + $0x10] sm:$0xff]
  %v383 = vld [vmem:[%s2 + $0x18] sm:$0xff]
  %v384 = vld [vmem:[%s2 + $0x20] sm:$0xff]
  %v385 = vld [vmem:[%s2 + $0x28] sm:$0xff]
  %v386 = vld [vmem:[%s2 + $0x30] sm:$0xff]
  %v387 = vld [vmem:[%s2 + $0x38] sm:$0xff]
  %v388 = vld [vmem:[%s3] sm:$0xff]
  %v389 = vld [vmem:[%s3 + $0x8] sm:$0xff]
  %v390 = vld [vmem:[%s3 + $0x10] sm:$0xff]
  %v391 = vld [vmem:[%s3 + $0x18] sm:$0xff]
  %v392 = vld [vmem:[%s3 + $0x20] sm:$0xff]
  %v393 = vld [vmem:[%s3 + $0x28] sm:$0xff]
  %v394 = vld [vmem:[%s3 + $0x30] sm:$0xff]
  %v395 = vld [vmem:[%s3 + $0x38] sm:$0xff]
  %397 = vset.pattern.permute.xlu0 0
  %398 = vperm.xlu0 %397, %v388
  %v399 = vpop.permute.xlu0 %398
  %402 = vset.pattern.permute.xlu0 0
  %403 = vperm.xlu0 %402, %v389
  %v404 = vpop.permute.xlu0 %403
  %407 = vset.pattern.permute.xlu0 0
  %408 = vperm.xlu0 %407, %v390
  %v409 = vpop.permute.xlu0 %408
  %412 = vset.pattern.permute.xlu0 0
  %413 = vperm.xlu0 %412, %v391
  %v414 = vpop.permute.xlu0 %413
  %417 = vset.pattern.permute.xlu0 0
  %418 = vperm.xlu0 %417, %v392
  %v419 = vpop.permute.xlu0 %418
  %422 = vset.pattern.permute.xlu0 0
  %423 = vperm.xlu0 %422, %v393
  %v424 = vpop.permute.xlu0 %423
  %427 = vset.pattern.permute.xlu0 0
  %428 = vperm.xlu0 %427, %v394
  %v429 = vpop.permute.xlu0 %428
  %432 = vset.pattern.permute.xlu0 0
  %433 = vperm.xlu0 %432, %v395
  %v434 = vpop.permute.xlu0 %433
  %v436 = vmul.f32 %v380, %v399
  %v437 = vmul.f32 %v381, %v404
  %v438 = vmul.f32 %v382, %v409
  %v439 = vmul.f32 %v383, %v414
  %v440 = vmul.f32 %v384, %v419
  %v441 = vmul.f32 %v385, %v424
  %v442 = vmul.f32 %v386, %v429
  %v443 = vmul.f32 %v387, %v434
  %v444 = vsel %vm95, %v436, 0.0
  %v445 = vrot.slane %v444, 4
  %v446 = vadd.f32 %v444, %v445
  %v447 = vrot.slane %v446, 2
  %v448 = vadd.f32 %v446, %v447
  %v449 = vrot.slane %v448, 1
  %v450 = vadd.f32 %v448, %v449
  %v451 = vsel %vm95, %v437, 0.0
  %v452 = vrot.slane %v451, 4
  %v453 = vadd.f32 %v451, %v452
  %v454 = vrot.slane %v453, 2
  %v455 = vadd.f32 %v453, %v454
  %v456 = vrot.slane %v455, 1
  %v457 = vadd.f32 %v455, %v456
  %v458 = vsel %vm95, %v438, 0.0
  %v459 = vrot.slane %v458, 4
  %v460 = vadd.f32 %v458, %v459
  %v461 = vrot.slane %v460, 2
  %v462 = vadd.f32 %v460, %v461
  %v463 = vrot.slane %v462, 1
  %v464 = vadd.f32 %v462, %v463
  %v465 = vsel %vm95, %v439, 0.0
  %v466 = vrot.slane %v465, 4
  %v467 = vadd.f32 %v465, %v466
  %v468 = vrot.slane %v467, 2
  %v469 = vadd.f32 %v467, %v468
  %v470 = vrot.slane %v469, 1
  %v471 = vadd.f32 %v469, %v470
  %v472 = vsel %vm95, %v440, 0.0
  %v473 = vrot.slane %v472, 4
  %v474 = vadd.f32 %v472, %v473
  %v475 = vrot.slane %v474, 2
  %v476 = vadd.f32 %v474, %v475
  %v477 = vrot.slane %v476, 1
  %v478 = vadd.f32 %v476, %v477
  %v479 = vsel %vm95, %v441, 0.0
  %v480 = vrot.slane %v479, 4
  %v481 = vadd.f32 %v479, %v480
  %v482 = vrot.slane %v481, 2
  %v483 = vadd.f32 %v481, %v482
  %v484 = vrot.slane %v483, 1
  %v485 = vadd.f32 %v483, %v484
  %v486 = vsel %vm95, %v442, 0.0
  %v487 = vrot.slane %v486, 4
  %v488 = vadd.f32 %v486, %v487
  %v489 = vrot.slane %v488, 2
  %v490 = vadd.f32 %v488, %v489
  %v491 = vrot.slane %v490, 1
  %v492 = vadd.f32 %v490, %v491
  %v493 = vsel %vm95, %v443, 0.0
  %v494 = vrot.slane %v493, 4
  %v495 = vadd.f32 %v493, %v494
  %v496 = vrot.slane %v495, 2
  %v497 = vadd.f32 %v495, %v496
  %v498 = vrot.slane %v497, 1
  %v499 = vadd.f32 %v497, %v498
  %v500 = vsel %vm152, %v388, 0.0
  %v501 = vrot.slane %v500, 4
  %v502 = vadd.f32 %v500, %v501
  %v503 = vrot.slane %v502, 2
  %v504 = vadd.f32 %v502, %v503
  %v505 = vrot.slane %v504, 1
  %v506 = vadd.f32 %v504, %v505
  %v507 = vsel %vm152, %v389, 0.0
  %v508 = vrot.slane %v507, 4
  %v509 = vadd.f32 %v507, %v508
  %v510 = vrot.slane %v509, 2
  %v511 = vadd.f32 %v509, %v510
  %v512 = vrot.slane %v511, 1
  %v513 = vadd.f32 %v511, %v512
  %v514 = vsel %vm152, %v390, 0.0
  %v515 = vrot.slane %v514, 4
  %v516 = vadd.f32 %v514, %v515
  %v517 = vrot.slane %v516, 2
  %v518 = vadd.f32 %v516, %v517
  %v519 = vrot.slane %v518, 1
  %v520 = vadd.f32 %v518, %v519
  %v521 = vsel %vm152, %v391, 0.0
  %v522 = vrot.slane %v521, 4
  %v523 = vadd.f32 %v521, %v522
  %v524 = vrot.slane %v523, 2
  %v525 = vadd.f32 %v523, %v524
  %v526 = vrot.slane %v525, 1
  %v527 = vadd.f32 %v525, %v526
  %v528 = vsel %vm152, %v392, 0.0
  %v529 = vrot.slane %v528, 4
  %v530 = vadd.f32 %v528, %v529
  %v531 = vrot.slane %v530, 2
  %v532 = vadd.f32 %v530, %v531
  %v533 = vrot.slane %v532, 1
  %v534 = vadd.f32 %v532, %v533
  %v535 = vsel %vm152, %v393, 0.0
  %v536 = vrot.slane %v535, 4
  %v537 = vadd.f32 %v535, %v536
  %v538 = vrot.slane %v537, 2
  %v539 = vadd.f32 %v537, %v538
  %v540 = vrot.slane %v539, 1
  %v541 = vadd.f32 %v539, %v540
  %v542 = vsel %vm152, %v394, 0.0
  %v543 = vrot.slane %v542, 4
  %v544 = vadd.f32 %v542, %v543
  %v545 = vrot.slane %v544, 2
  %v546 = vadd.f32 %v544, %v545
  %v547 = vrot.slane %v546, 1
  %v548 = vadd.f32 %v546, %v547
  %v549 = vsel %vm152, %v395, 0.0
  %v550 = vrot.slane %v549, 4
  %v551 = vadd.f32 %v549, %v550
  %v552 = vrot.slane %v551, 2
  %v553 = vadd.f32 %v551, %v552
  %v554 = vrot.slane %v553, 1
  %v555 = vadd.f32 %v553, %v554
  %v556 = vmax.f32 %v506, 1.0
  %v557 = vmax.f32 %v513, 1.0
  %v558 = vmax.f32 %v520, 1.0
  %v559 = vmax.f32 %v527, 1.0
  %v560 = vmax.f32 %v534, 1.0
  %v561 = vmax.f32 %v541, 1.0
  %v562 = vmax.f32 %v548, 1.0
  %v563 = vmax.f32 %v555, 1.0
  %565 = vset.pattern.permute.xlu0 0
  %566 = vperm.xlu0 %565, %v556
  %v567 = vpop.permute.xlu0 %566
  %570 = vset.pattern.permute.xlu0 0
  %571 = vperm.xlu0 %570, %v557
  %v572 = vpop.permute.xlu0 %571
  %575 = vset.pattern.permute.xlu0 0
  %576 = vperm.xlu0 %575, %v558
  %v577 = vpop.permute.xlu0 %576
  %580 = vset.pattern.permute.xlu0 0
  %581 = vperm.xlu0 %580, %v559
  %v582 = vpop.permute.xlu0 %581
  %585 = vset.pattern.permute.xlu0 0
  %586 = vperm.xlu0 %585, %v560
  %v587 = vpop.permute.xlu0 %586
  %590 = vset.pattern.permute.xlu0 0
  %591 = vperm.xlu0 %590, %v561
  %v592 = vpop.permute.xlu0 %591
  %595 = vset.pattern.permute.xlu0 0
  %596 = vperm.xlu0 %595, %v562
  %v597 = vpop.permute.xlu0 %596
  %600 = vset.pattern.permute.xlu0 0
  %601 = vperm.xlu0 %600, %v563
  %v602 = vpop.permute.xlu0 %601
  %v604 = vrcp.pop %v567
  %v605 = vmul.f32 %v450, %v604
  %v606 = vrcp.pop %v572
  %v607 = vmul.f32 %v457, %v606
  %v608 = vrcp.pop %v577
  %v609 = vmul.f32 %v464, %v608
  %v610 = vrcp.pop %v582
  %v611 = vmul.f32 %v471, %v610
  %v612 = vrcp.pop %v587
  %v613 = vmul.f32 %v478, %v612
  %v614 = vrcp.pop %v592
  %v615 = vmul.f32 %v485, %v614
  %v616 = vrcp.pop %v597
  %v617 = vmul.f32 %v492, %v616
  %v618 = vrcp.pop %v602
  %v619 = vmul.f32 %v499, %v618
  %v620 = vld [vmem:[%s6] sm:$0xff]
  %v621 = vld [vmem:[%s6 + $0x8] sm:$0xff]
  %v622 = vld [vmem:[%s6 + $0x10] sm:$0xff]
  %v623 = vld [vmem:[%s6 + $0x18] sm:$0xff]
  %v624 = vld [vmem:[%s7] sm:$0x1]
  %v626 = vlaneseq
  %v627 = vshrl.u32 %v626, 7
  %v628 = vsub.s32 0, %v627
  %v629 = vrot.slane %v624, %v628
  %v639 = vsel %vm292, %v607, %v605
  %v640 = vsel %vm294, %v609, %v639
  %v641 = vsel %vm296, %v611, %v640
  %v642 = vsel %vm298, %v613, %v641
  %v643 = vsel %vm300, %v615, %v642
  %v644 = vsel %vm302, %v617, %v643
  %v645 = vsel %vm304, %v619, %v644
  %v646 = vsel %vm95, %v645, 0
  %648 = vmatprep.subr.mxu0 0.0
  %649 = vmatpush1.msra.mxu0 %v620
  %650 = vmatprep.subr.mxu0 0.0
  %651 = vmatpush1.msra.mxu0 %v621
  %652 = vmatprep.subr.mxu0 0.0
  %653 = vmatpush1.msra.mxu0 %v622
  %654 = vmatprep.subr.mxu0 0.0
  %655 = vmatpush1.msra.mxu0 %v623
  %656 = vmatprep.subr.mxu0 0.0
  %657 = vmatpush1.msra.mxu0 0.0
  %658 = vmatprep.subr.mxu0 0.0
  %659 = vmatpush1.msra.mxu0 0.0
  %660 = vmatprep.subr.mxu0 0.0
  %661 = vmatpush1.msra.mxu0 0.0
  %662 = vmatprep.subr.mxu0 0.0
  %663 = vmatpush1.msra.mxu0 0.0
  %664 = vmatprep.subr.mxu0 0.0
  %665 = vmatpush1.msra.mxu0 0.0
  %666 = vmatprep.subr.mxu0 0.0
  %667 = vmatpush1.msra.mxu0 0.0
  %668 = vmatprep.subr.mxu0 0.0
  %669 = vmatpush1.msra.mxu0 0.0
  %670 = vmatprep.subr.mxu0 0.0
  %671 = vmatpush1.msra.mxu0 0.0
  %672 = vmatprep.subr.mxu0 0.0
  %673 = vmatpush1.msra.mxu0 0.0
  %674 = vmatprep.subr.mxu0 0.0
  %675 = vmatpush1.msra.mxu0 0.0
  %676 = vmatprep.subr.mxu0 0.0
  %677 = vmatpush1.msra.mxu0 0.0
  %678 = vmatprep.subr.mxu0 0.0
  %679 = vmatpush1.msra.mxu0 0.0
  %680 = vmatprep.subr.mxu0 0.0
  %681 = vmatpush1.msra.mxu0 0.0
  %682 = vmatprep.subr.mxu0 0.0
  %683 = vmatpush1.msra.mxu0 0.0
  %684 = vmatprep.subr.mxu0 0.0
  %685 = vmatpush1.msra.mxu0 0.0
  %686 = vmatprep.subr.mxu0 0.0
  %687 = vmatpush1.msra.mxu0 0.0
  %688 = vmatprep.subr.mxu0 0.0
  %689 = vmatpush1.msra.mxu0 0.0
  %690 = vmatprep.subr.mxu0 0.0
  %691 = vmatpush1.msra.mxu0 0.0
  %692 = vmatprep.subr.mxu0 0.0
  %693 = vmatpush1.msra.mxu0 0.0
  %694 = vmatprep.subr.mxu0 0.0
  %695 = vmatpush1.msra.mxu0 0.0
  %696 = vmatprep.subr.mxu0 0.0
  %697 = vmatpush1.msra.mxu0 0.0
  %698 = vmatprep.subr.mxu0 0.0
  %699 = vmatpush1.msra.mxu0 0.0
  %700 = vmatprep.subr.mxu0 0.0
  %701 = vmatpush1.msra.mxu0 0.0
  %702 = vmatprep.subr.mxu0 0.0
  %703 = vmatpush1.msra.mxu0 0.0
  %704 = vmatprep.subr.mxu0 0.0
  %705 = vmatpush1.msra.mxu0 0.0
  %706 = vmatprep.subr.mxu0 0.0
  %707 = vmatpush1.msra.mxu0 0.0
  %708 = vmatprep.subr.mxu0 0.0
  %709 = vmatpush1.msra.mxu0 0.0
  %710 = vmatprep.subr.mxu0 0.0
  %711 = vmatpush1.msra.mxu0 0.0
  %712 = vmatprep.mubr.f32.mxu0 0.0
  %713 = vmatmul.mubr.f32.gmra.mrb[0].mxu0 %v646
  %v714 = vpop.f32.mrb[0].mxu0
  %v715 = vadd.f32 %v629, %v714
  %v716 = vpop.f32.mrb[0].mxu0
  %717 = vdwg.mxu0
  %v718 = vtanh.pop %v715
  %719 = vst.msk [vmem:[%s9] sm:$0xff] %vm95, %v718
  // Predicated region
  $region34: #{dual_encoder_forward.1} parent=0 // pred_check
    _
  $region35: #{dual_encoder_forward.1} parent=0 // pred_check_branch
    %721 = sbr.rel (0) target = $region37
  $region36: #{dual_encoder_forward.1} parent=0 // pred_region
    _
  $region37: #{dual_encoder_forward.1} parent=0 // pred_fallthru
    _
  // Predicated region
  $region38: #{dual_encoder_forward.1} parent=0 // pred_check
    _
  $region39: #{dual_encoder_forward.1} parent=0 // pred_check_branch
    %723 = sbr.rel (0) target = $region41
  $region40: #{dual_encoder_forward.1} parent=0 // pred_region
    _
  $region41: #{dual_encoder_forward.1} parent=0 // pred_fallthru
    _
  // Predicated region
  $region42: #{dual_encoder_forward.1} parent=0 // pred_check
    _
  $region43: #{dual_encoder_forward.1} parent=0 // pred_check_branch
    %725 = sbr.rel (0) target = $region45
  $region44: #{dual_encoder_forward.1} parent=0 // pred_region
    _
  $region45: #{dual_encoder_forward.1} parent=0 // pred_fallthru
    _
  // Predicated region
  $region46: #{dual_encoder_forward.1} parent=0 // pred_check
    _
  $region47: #{dual_encoder_forward.1} parent=0 // pred_check_branch
    %727 = sbr.rel (0) target = $region49
  $region48: #{dual_encoder_forward.1} parent=0 // pred_region
    _
  $region49: #{dual_encoder_forward.1} parent=0 // pred_fallthru
    _

</llo_original>
